<compile_context>
chip_gen: v7x
topology: tpu7x:2x2x1
jax: 0.10.0
libtpu: 0.0.40
codegen_flags: <defaults>
</compile_context>

<pallas_src>
import functools

import jax
import jax.numpy as jnp
from jax.experimental import pallas as pl
from jax.experimental.pallas import tpu as pltpu


def lstm_fc_kernel(x_ref, w_ih_ref, w_hh_ref, b_ref, w_fc_ref, b_fc_ref, out_ref,
                   *, seq_len, batch):
    """Single-layer LSTM recurrence + final Linear on the last hidden state.

    x_ref   : (T*batch, D)  time-major input, batch already padded to a sublane tile
    w_ih_ref: (D, 4H)       input->gates weights, PyTorch order [i | f | g | o],
                            g columns pre-scaled by 2 (tanh fold)
    w_hh_ref: (H, 4H)       hidden->gates weights, same layout / scaling
    b_ref   : (1, 4H)       b_ih + b_hh, same layout / scaling
    w_fc_ref: (1, H)        final linear weight row (output_size == 1)
    b_fc_ref: (1, 1)        final linear bias
    out_ref : (batch, 1)    only the first (unpadded) B rows are meaningful
    """
    H = w_hh_ref.shape[0]
    w_hh = w_hh_ref[...]

    # Hoisted input projection: one MXU call for the whole sequence, bias folded in.
    gates_x = (
        jnp.dot(x_ref[...], w_ih_ref[...], preferred_element_type=jnp.float32)
        + b_ref[...]
    )  # (T*batch, 4H)

    h = jnp.zeros((batch, H), dtype=jnp.float32)
    c = jnp.zeros((batch, H), dtype=jnp.float32)

    # Fully (statically) unrolled recurrence: one h @ W_hh matmul per step; each
    # gates_x row-slice is exactly one (8, 128) vreg tile (batch padded to 8).
    for t in range(seq_len):
        g_t = gates_x[t * batch:(t + 1) * batch, :] + jnp.dot(
            h, w_hh, preferred_element_type=jnp.float32)          # (batch, 4H)
        s = jax.nn.sigmoid(g_t)                                    # ONE full-lane EUP launch
        i = s[:, 0 * H:1 * H]
        f = s[:, 1 * H:2 * H]
        g = 2.0 * s[:, 2 * H:3 * H] - 1.0                          # tanh(x) = 2*sigmoid(2x) - 1
        o = s[:, 3 * H:4 * H]
        c = f * c + i * g
        h = o * jnp.tanh(c)

    # Final Linear with output_size == 1: VPU multiply + lane reduction.
    out = jnp.sum(h * w_fc_ref[...], axis=-1, keepdims=True) + b_fc_ref[...]
    out_ref[...] = out.astype(out_ref.dtype)


def prepare_params(params):
    """One-time weight relayout: transpose, bias fold, and tanh->sigmoid 2x scaling.

    Call this ONCE at parameter-setup time (outside the per-step forward) so the
    per-call path contains no weight transposes / gathers / adds.
    """
    w_ih, w_hh, b_ih, b_hh, w_fc, b_fc = params
    H = w_hh.shape[1]  # PyTorch weight_hh_l0 shape = (4H, H)

    # Pre-scale the g-gate columns (PyTorch slot 2H:3H) by 2 so the kernel can use
    # the exact identity tanh(x) = 2*sigmoid(2x) - 1 with a single sigmoid over 4H.
    scale = jnp.concatenate([
        jnp.ones((2 * H,), jnp.float32),        # i, f
        jnp.full((H,), 2.0, jnp.float32),       # g
        jnp.ones((H,), jnp.float32),            # o
    ])

    w_ih_t = jnp.asarray(w_ih, jnp.float32).T * scale                       # (D, 4H)
    w_hh_t = jnp.asarray(w_hh, jnp.float32).T * scale                       # (H, 4H)
    b = ((jnp.asarray(b_ih, jnp.float32) + jnp.asarray(b_hh, jnp.float32))
         * scale).reshape(1, 4 * H)                                         # (1, 4H)
    w_fc_row = jnp.asarray(w_fc, jnp.float32).reshape(1, H)                 # (1, H)
    b_fc2 = jnp.asarray(b_fc, jnp.float32).reshape(1, 1)                    # (1, 1)
    return (w_ih_t, w_hh_t, b, w_fc_row, b_fc2)


def lstm_model_forward(x, prepped):
    """x: (B, T, D) batch-first, like the PyTorch module. Returns (B, 1)."""
    w_ih_t, w_hh_t, b, w_fc_row, b_fc2 = prepped
    B, T, D = x.shape
    H = w_hh_t.shape[0]

    # Pad the batch up to the f32 sublane tile (8 rows) so every per-step slice in
    # the kernel is a whole (8, 128) vreg tile.
    BP = max(8, ((B + 7) // 8) * 8)
    x_tm = jnp.transpose(x, (1, 0, 2)).astype(jnp.float32)                  # (T, B, D)
    x_tm = jnp.pad(x_tm, ((0, 0), (0, BP - B), (0, 0)))                     # (T, BP, D)
    x_flat = x_tm.reshape(T * BP, D)

    vmem = pl.BlockSpec(memory_space=pltpu.MemorySpace.VMEM)
    kernel = functools.partial(lstm_fc_kernel, seq_len=T, batch=BP)
    out = pl.pallas_call(
        kernel,
        out_shape=jax.ShapeDtypeStruct((BP, 1), jnp.float32),
        in_specs=[vmem] * 6,
        out_specs=vmem,
    )(x_flat, w_ih_t, w_hh_t, b, w_fc_row, b_fc2)
    return out[:B]  # padded rows are finite but meaningless -> drop them


def lstm_model_reference(x, params):
    """Pure-JAX reference matching torch.nn.LSTM(batch_first=True) + Linear semantics."""
    w_ih, w_hh, b_ih, b_hh, w_fc, b_fc = params
    B, T, D = x.shape
    H = w_hh.shape[1]
    h = jnp.zeros((B, H), jnp.float32)
    c = jnp.zeros((B, H), jnp.float32)
    for t in range(T):
        gates = x[:, t, :] @ w_ih.T + h @ w_hh.T + b_ih + b_hh
        i = jax.nn.sigmoid(gates[:, 0 * H:1 * H])
        f = jax.nn.sigmoid(gates[:, 1 * H:2 * H])
        g = jnp.tanh(gates[:, 2 * H:3 * H])
        o = jax.nn.sigmoid(gates[:, 3 * H:4 * H])
        c = f * c + i * g
        h = o * jnp.tanh(c)
    return h @ w_fc.T + b_fc


def init_params(key, input_size, hidden_size, output_size):
    """Deterministic synthetic params with PyTorch-style shapes/init range."""
    ks = jax.random.split(key, 6)
    bound = 1.0 / jnp.sqrt(hidden_size)
    w_ih = jax.random.uniform(ks[0], (4 * hidden_size, input_size), jnp.float32, -bound, bound)
    w_hh = jax.random.uniform(ks[1], (4 * hidden_size, hidden_size), jnp.float32, -bound, bound)
    b_ih = jax.random.uniform(ks[2], (4 * hidden_size,), jnp.float32, -bound, bound)
    b_hh = jax.random.uniform(ks[3], (4 * hidden_size,), jnp.float32, -bound, bound)
    w_fc = jax.random.uniform(ks[4], (output_size, hidden_size), jnp.float32, -bound, bound)
    b_fc = jax.random.uniform(ks[5], (output_size,), jnp.float32, -bound, bound)
    return (w_ih, w_hh, b_ih, b_hh, w_fc, b_fc)


if __name__ == "__main__":
    # Small shapes consistent with the module: (batch, seq, features) -> (batch, 1)
    batch, seq, input_size = 2, 8, 4
    hidden_size, output_size = 32, 1

    key = jax.random.PRNGKey(0)
    k_x, k_p = jax.random.split(key)
    x = jax.random.normal(k_x, (batch, seq, input_size), dtype=jnp.float32)
    params = init_params(k_p, input_size, hidden_size, output_size)

    # One-time weight relayout (transpose / bias fold / tanh-fold scaling) done here,
    # NOT inside the per-call forward.
    prepped = jax.block_until_ready(prepare_params(params))

    forward = jax.jit(lstm_model_forward)
    out = forward(x, prepped)
    out = jax.block_until_ready(out)

    ref = lstm_model_reference(x, params)
    assert out.shape == (batch, output_size)
    assert jnp.allclose(out, ref, atol=1e-4, rtol=1e-4), (out, ref)

    print("KERNEL_OK")
</pallas_src>

<mosaic_0001>
module attributes {stable_mosaic.version = 11 : i64} {
  func.func @lstm_fc_kernel(%arg0: memref<64x4xf32, #tpu.memory_space<vmem>>, %arg1: memref<4x128xf32, #tpu.memory_space<vmem>>, %arg2: memref<32x128xf32, #tpu.memory_space<vmem>>, %arg3: memref<1x128xf32, #tpu.memory_space<vmem>>, %arg4: memref<1x32xf32, #tpu.memory_space<vmem>>, %arg5: memref<1x1xf32, #tpu.memory_space<vmem>>, %arg6: memref<8x1xf32, #tpu.memory_space<vmem>>) attributes {dimension_semantics = [], scalar_prefetch = 0 : i64, scratch_operands = 0 : i64, tpu.core_type = #tpu.core_type<tc>} {
    %c0 = arith.constant 0 : index
    %c0_0 = arith.constant 0 : index
    %0 = vector.load %arg2[%c0, %c0_0] : memref<32x128xf32, #tpu.memory_space<vmem>>, vector<32x128xf32>
    %c0_1 = arith.constant 0 : index
    %c0_2 = arith.constant 0 : index
    %1 = vector.load %arg0[%c0_1, %c0_2] : memref<64x4xf32, #tpu.memory_space<vmem>>, vector<64x4xf32>
    %c0_3 = arith.constant 0 : index
    %c0_4 = arith.constant 0 : index
    %2 = vector.load %arg1[%c0_3, %c0_4] : memref<4x128xf32, #tpu.memory_space<vmem>>, vector<4x128xf32>
    %cst = arith.constant dense<0.000000e+00> : vector<64x128xf32>
    %3 = tpu.matmul %1, %2, %cst {dimension_numbers = #tpu.dot_dimension_numbers<[1], [0], [0], [1], [0, 0, 1, 1], [], []>} : vector<64x4xf32>, vector<4x128xf32>, vector<64x128xf32> -> vector<64x128xf32>
    %c0_5 = arith.constant 0 : index
    %c0_6 = arith.constant 0 : index
    %4 = vector.load %arg3[%c0_5, %c0_6] : memref<1x128xf32, #tpu.memory_space<vmem>>, vector<1x128xf32>
    %5 = vector.broadcast %4 : vector<1x128xf32> to vector<64x128xf32>
    %6 = arith.addf %3, %5 : vector<64x128xf32>
    %cst_7 = arith.constant 0.000000e+00 : f32
    %7 = vector.broadcast %cst_7 : f32 to vector<8x32xf32>
    %cst_8 = arith.constant 0.000000e+00 : f32
    %8 = vector.broadcast %cst_8 : f32 to vector<8x32xf32>
    %9 = vector.extract_strided_slice %6 {offsets = [0, 0], sizes = [8, 128], strides = [1, 1]} : vector<64x128xf32> to vector<8x128xf32>
    %cst_9 = arith.constant dense<0.000000e+00> : vector<8x128xf32>
    %10 = tpu.matmul %7, %0, %cst_9 {dimension_numbers = #tpu.dot_dimension_numbers<[1], [0], [0], [1], [0, 0, 1, 1], [], []>} : vector<8x32xf32>, vector<32x128xf32>, vector<8x128xf32> -> vector<8x128xf32>
    %11 = arith.addf %9, %10 : vector<8x128xf32>
    %12 = arith.negf %11 : vector<8x128xf32>
    %13 = math.exp %12 : vector<8x128xf32>
    %cst_10 = arith.constant 1.000000e+00 : f32
    %14 = vector.broadcast %cst_10 : f32 to vector<8x128xf32>
    %15 = arith.addf %14, %13 : vector<8x128xf32>
    %16 = arith.divf %14, %15 : vector<8x128xf32>
    %17 = vector.extract_strided_slice %16 {offsets = [0, 0], sizes = [8, 32], strides = [1, 1]} : vector<8x128xf32> to vector<8x32xf32>
    %18 = vector.extract_strided_slice %16 {offsets = [0, 32], sizes = [8, 32], strides = [1, 1]} : vector<8x128xf32> to vector<8x32xf32>
    %19 = vector.extract_strided_slice %16 {offsets = [0, 64], sizes = [8, 32], strides = [1, 1]} : vector<8x128xf32> to vector<8x32xf32>
    %cst_11 = arith.constant 2.000000e+00 : f32
    %20 = vector.broadcast %cst_11 : f32 to vector<8x32xf32>
    %21 = arith.mulf %20, %19 : vector<8x32xf32>
    %cst_12 = arith.constant 1.000000e+00 : f32
    %22 = vector.broadcast %cst_12 : f32 to vector<8x32xf32>
    %23 = arith.subf %21, %22 : vector<8x32xf32>
    %24 = vector.extract_strided_slice %16 {offsets = [0, 96], sizes = [8, 32], strides = [1, 1]} : vector<8x128xf32> to vector<8x32xf32>
    %25 = arith.mulf %18, %8 : vector<8x32xf32>
    %26 = arith.mulf %17, %23 : vector<8x32xf32>
    %27 = arith.addf %25, %26 : vector<8x32xf32>
    %28 = math.tanh %27 : vector<8x32xf32>
    %29 = arith.mulf %24, %28 : vector<8x32xf32>
    %30 = vector.extract_strided_slice %6 {offsets = [8, 0], sizes = [8, 128], strides = [1, 1]} : vector<64x128xf32> to vector<8x128xf32>
    %cst_13 = arith.constant dense<0.000000e+00> : vector<8x128xf32>
    %31 = tpu.matmul %29, %0, %cst_13 {dimension_numbers = #tpu.dot_dimension_numbers<[1], [0], [0], [1], [0, 0, 1, 1], [], []>} : vector<8x32xf32>, vector<32x128xf32>, vector<8x128xf32> -> vector<8x128xf32>
    %32 = arith.addf %30, %31 : vector<8x128xf32>
    %33 = arith.negf %32 : vector<8x128xf32>
    %34 = math.exp %33 : vector<8x128xf32>
    %cst_14 = arith.constant 1.000000e+00 : f32
    %35 = vector.broadcast %cst_14 : f32 to vector<8x128xf32>
    %36 = arith.addf %35, %34 : vector<8x128xf32>
    %37 = arith.divf %35, %36 : vector<8x128xf32>
    %38 = vector.extract_strided_slice %37 {offsets = [0, 0], sizes = [8, 32], strides = [1, 1]} : vector<8x128xf32> to vector<8x32xf32>
    %39 = vector.extract_strided_slice %37 {offsets = [0, 32], sizes = [8, 32], strides = [1, 1]} : vector<8x128xf32> to vector<8x32xf32>
    %40 = vector.extract_strided_slice %37 {offsets = [0, 64], sizes = [8, 32], strides = [1, 1]} : vector<8x128xf32> to vector<8x32xf32>
    %cst_15 = arith.constant 2.000000e+00 : f32
    %41 = vector.broadcast %cst_15 : f32 to vector<8x32xf32>
    %42 = arith.mulf %41, %40 : vector<8x32xf32>
    %cst_16 = arith.constant 1.000000e+00 : f32
    %43 = vector.broadcast %cst_16 : f32 to vector<8x32xf32>
    %44 = arith.subf %42, %43 : vector<8x32xf32>
    %45 = vector.extract_strided_slice %37 {offsets = [0, 96], sizes = [8, 32], strides = [1, 1]} : vector<8x128xf32> to vector<8x32xf32>
    %46 = arith.mulf %39, %27 : vector<8x32xf32>
    %47 = arith.mulf %38, %44 : vector<8x32xf32>
    %48 = arith.addf %46, %47 : vector<8x32xf32>
    %49 = math.tanh %48 : vector<8x32xf32>
    %50 = arith.mulf %45, %49 : vector<8x32xf32>
    %51 = vector.extract_strided_slice %6 {offsets = [16, 0], sizes = [8, 128], strides = [1, 1]} : vector<64x128xf32> to vector<8x128xf32>
    %cst_17 = arith.constant dense<0.000000e+00> : vector<8x128xf32>
    %52 = tpu.matmul %50, %0, %cst_17 {dimension_numbers = #tpu.dot_dimension_numbers<[1], [0], [0], [1], [0, 0, 1, 1], [], []>} : vector<8x32xf32>, vector<32x128xf32>, vector<8x128xf32> -> vector<8x128xf32>
    %53 = arith.addf %51, %52 : vector<8x128xf32>
    %54 = arith.negf %53 : vector<8x128xf32>
    %55 = math.exp %54 : vector<8x128xf32>
    %cst_18 = arith.constant 1.000000e+00 : f32
    %56 = vector.broadcast %cst_18 : f32 to vector<8x128xf32>
    %57 = arith.addf %56, %55 : vector<8x128xf32>
    %58 = arith.divf %56, %57 : vector<8x128xf32>
    %59 = vector.extract_strided_slice %58 {offsets = [0, 0], sizes = [8, 32], strides = [1, 1]} : vector<8x128xf32> to vector<8x32xf32>
    %60 = vector.extract_strided_slice %58 {offsets = [0, 32], sizes = [8, 32], strides = [1, 1]} : vector<8x128xf32> to vector<8x32xf32>
    %61 = vector.extract_strided_slice %58 {offsets = [0, 64], sizes = [8, 32], strides = [1, 1]} : vector<8x128xf32> to vector<8x32xf32>
    %cst_19 = arith.constant 2.000000e+00 : f32
    %62 = vector.broadcast %cst_19 : f32 to vector<8x32xf32>
    %63 = arith.mulf %62, %61 : vector<8x32xf32>
    %cst_20 = arith.constant 1.000000e+00 : f32
    %64 = vector.broadcast %cst_20 : f32 to vector<8x32xf32>
    %65 = arith.subf %63, %64 : vector<8x32xf32>
    %66 = vector.extract_strided_slice %58 {offsets = [0, 96], sizes = [8, 32], strides = [1, 1]} : vector<8x128xf32> to vector<8x32xf32>
    %67 = arith.mulf %60, %48 : vector<8x32xf32>
    %68 = arith.mulf %59, %65 : vector<8x32xf32>
    %69 = arith.addf %67, %68 : vector<8x32xf32>
    %70 = math.tanh %69 : vector<8x32xf32>
    %71 = arith.mulf %66, %70 : vector<8x32xf32>
    %72 = vector.extract_strided_slice %6 {offsets = [24, 0], sizes = [8, 128], strides = [1, 1]} : vector<64x128xf32> to vector<8x128xf32>
    %cst_21 = arith.constant dense<0.000000e+00> : vector<8x128xf32>
    %73 = tpu.matmul %71, %0, %cst_21 {dimension_numbers = #tpu.dot_dimension_numbers<[1], [0], [0], [1], [0, 0, 1, 1], [], []>} : vector<8x32xf32>, vector<32x128xf32>, vector<8x128xf32> -> vector<8x128xf32>
    %74 = arith.addf %72, %73 : vector<8x128xf32>
    %75 = arith.negf %74 : vector<8x128xf32>
    %76 = math.exp %75 : vector<8x128xf32>
    %cst_22 = arith.constant 1.000000e+00 : f32
    %77 = vector.broadcast %cst_22 : f32 to vector<8x128xf32>
    %78 = arith.addf %77, %76 : vector<8x128xf32>
    %79 = arith.divf %77, %78 : vector<8x128xf32>
    %80 = vector.extract_strided_slice %79 {offsets = [0, 0], sizes = [8, 32], strides = [1, 1]} : vector<8x128xf32> to vector<8x32xf32>
    %81 = vector.extract_strided_slice %79 {offsets = [0, 32], sizes = [8, 32], strides = [1, 1]} : vector<8x128xf32> to vector<8x32xf32>
    %82 = vector.extract_strided_slice %79 {offsets = [0, 64], sizes = [8, 32], strides = [1, 1]} : vector<8x128xf32> to vector<8x32xf32>
    %cst_23 = arith.constant 2.000000e+00 : f32
    %83 = vector.broadcast %cst_23 : f32 to vector<8x32xf32>
    %84 = arith.mulf %83, %82 : vector<8x32xf32>
    %cst_24 = arith.constant 1.000000e+00 : f32
    %85 = vector.broadcast %cst_24 : f32 to vector<8x32xf32>
    %86 = arith.subf %84, %85 : vector<8x32xf32>
    %87 = vector.extract_strided_slice %79 {offsets = [0, 96], sizes = [8, 32], strides = [1, 1]} : vector<8x128xf32> to vector<8x32xf32>
    %88 = arith.mulf %81, %69 : vector<8x32xf32>
    %89 = arith.mulf %80, %86 : vector<8x32xf32>
    %90 = arith.addf %88, %89 : vector<8x32xf32>
    %91 = math.tanh %90 : vector<8x32xf32>
    %92 = arith.mulf %87, %91 : vector<8x32xf32>
    %93 = vector.extract_strided_slice %6 {offsets = [32, 0], sizes = [8, 128], strides = [1, 1]} : vector<64x128xf32> to vector<8x128xf32>
    %cst_25 = arith.constant dense<0.000000e+00> : vector<8x128xf32>
    %94 = tpu.matmul %92, %0, %cst_25 {dimension_numbers = #tpu.dot_dimension_numbers<[1], [0], [0], [1], [0, 0, 1, 1], [], []>} : vector<8x32xf32>, vector<32x128xf32>, vector<8x128xf32> -> vector<8x128xf32>
    %95 = arith.addf %93, %94 : vector<8x128xf32>
    %96 = arith.negf %95 : vector<8x128xf32>
    %97 = math.exp %96 : vector<8x128xf32>
    %cst_26 = arith.constant 1.000000e+00 : f32
    %98 = vector.broadcast %cst_26 : f32 to vector<8x128xf32>
    %99 = arith.addf %98, %97 : vector<8x128xf32>
    %100 = arith.divf %98, %99 : vector<8x128xf32>
    %101 = vector.extract_strided_slice %100 {offsets = [0, 0], sizes = [8, 32], strides = [1, 1]} : vector<8x128xf32> to vector<8x32xf32>
    %102 = vector.extract_strided_slice %100 {offsets = [0, 32], sizes = [8, 32], strides = [1, 1]} : vector<8x128xf32> to vector<8x32xf32>
    %103 = vector.extract_strided_slice %100 {offsets = [0, 64], sizes = [8, 32], strides = [1, 1]} : vector<8x128xf32> to vector<8x32xf32>
    %cst_27 = arith.constant 2.000000e+00 : f32
    %104 = vector.broadcast %cst_27 : f32 to vector<8x32xf32>
    %105 = arith.mulf %104, %103 : vector<8x32xf32>
    %cst_28 = arith.constant 1.000000e+00 : f32
    %106 = vector.broadcast %cst_28 : f32 to vector<8x32xf32>
    %107 = arith.subf %105, %106 : vector<8x32xf32>
    %108 = vector.extract_strided_slice %100 {offsets = [0, 96], sizes = [8, 32], strides = [1, 1]} : vector<8x128xf32> to vector<8x32xf32>
    %109 = arith.mulf %102, %90 : vector<8x32xf32>
    %110 = arith.mulf %101, %107 : vector<8x32xf32>
    %111 = arith.addf %109, %110 : vector<8x32xf32>
    %112 = math.tanh %111 : vector<8x32xf32>
    %113 = arith.mulf %108, %112 : vector<8x32xf32>
    %114 = vector.extract_strided_slice %6 {offsets = [40, 0], sizes = [8, 128], strides = [1, 1]} : vector<64x128xf32> to vector<8x128xf32>
    %cst_29 = arith.constant dense<0.000000e+00> : vector<8x128xf32>
    %115 = tpu.matmul %113, %0, %cst_29 {dimension_numbers = #tpu.dot_dimension_numbers<[1], [0], [0], [1], [0, 0, 1, 1], [], []>} : vector<8x32xf32>, vector<32x128xf32>, vector<8x128xf32> -> vector<8x128xf32>
    %116 = arith.addf %114, %115 : vector<8x128xf32>
    %117 = arith.negf %116 : vector<8x128xf32>
    %118 = math.exp %117 : vector<8x128xf32>
    %cst_30 = arith.constant 1.000000e+00 : f32
    %119 = vector.broadcast %cst_30 : f32 to vector<8x128xf32>
    %120 = arith.addf %119, %118 : vector<8x128xf32>
    %121 = arith.divf %119, %120 : vector<8x128xf32>
    %122 = vector.extract_strided_slice %121 {offsets = [0, 0], sizes = [8, 32], strides = [1, 1]} : vector<8x128xf32> to vector<8x32xf32>
    %123 = vector.extract_strided_slice %121 {offsets = [0, 32], sizes = [8, 32], strides = [1, 1]} : vector<8x128xf32> to vector<8x32xf32>
    %124 = vector.extract_strided_slice %121 {offsets = [0, 64], sizes = [8, 32], strides = [1, 1]} : vector<8x128xf32> to vector<8x32xf32>
    %cst_31 = arith.constant 2.000000e+00 : f32
    %125 = vector.broadcast %cst_31 : f32 to vector<8x32xf32>
    %126 = arith.mulf %125, %124 : vector<8x32xf32>
    %cst_32 = arith.constant 1.000000e+00 : f32
    %127 = vector.broadcast %cst_32 : f32 to vector<8x32xf32>
    %128 = arith.subf %126, %127 : vector<8x32xf32>
    %129 = vector.extract_strided_slice %121 {offsets = [0, 96], sizes = [8, 32], strides = [1, 1]} : vector<8x128xf32> to vector<8x32xf32>
    %130 = arith.mulf %123, %111 : vector<8x32xf32>
    %131 = arith.mulf %122, %128 : vector<8x32xf32>
    %132 = arith.addf %130, %131 : vector<8x32xf32>
    %133 = math.tanh %132 : vector<8x32xf32>
    %134 = arith.mulf %129, %133 : vector<8x32xf32>
    %135 = vector.extract_strided_slice %6 {offsets = [48, 0], sizes = [8, 128], strides = [1, 1]} : vector<64x128xf32> to vector<8x128xf32>
    %cst_33 = arith.constant dense<0.000000e+00> : vector<8x128xf32>
    %136 = tpu.matmul %134, %0, %cst_33 {dimension_numbers = #tpu.dot_dimension_numbers<[1], [0], [0], [1], [0, 0, 1, 1], [], []>} : vector<8x32xf32>, vector<32x128xf32>, vector<8x128xf32> -> vector<8x128xf32>
    %137 = arith.addf %135, %136 : vector<8x128xf32>
    %138 = arith.negf %137 : vector<8x128xf32>
    %139 = math.exp %138 : vector<8x128xf32>
    %cst_34 = arith.constant 1.000000e+00 : f32
    %140 = vector.broadcast %cst_34 : f32 to vector<8x128xf32>
    %141 = arith.addf %140, %139 : vector<8x128xf32>
    %142 = arith.divf %140, %141 : vector<8x128xf32>
    %143 = vector.extract_strided_slice %142 {offsets = [0, 0], sizes = [8, 32], strides = [1, 1]} : vector<8x128xf32> to vector<8x32xf32>
    %144 = vector.extract_strided_slice %142 {offsets = [0, 32], sizes = [8, 32], strides = [1, 1]} : vector<8x128xf32> to vector<8x32xf32>
    %145 = vector.extract_strided_slice %142 {offsets = [0, 64], sizes = [8, 32], strides = [1, 1]} : vector<8x128xf32> to vector<8x32xf32>
    %cst_35 = arith.constant 2.000000e+00 : f32
    %146 = vector.broadcast %cst_35 : f32 to vector<8x32xf32>
    %147 = arith.mulf %146, %145 : vector<8x32xf32>
    %cst_36 = arith.constant 1.000000e+00 : f32
    %148 = vector.broadcast %cst_36 : f32 to vector<8x32xf32>
    %149 = arith.subf %147, %148 : vector<8x32xf32>
    %150 = vector.extract_strided_slice %142 {offsets = [0, 96], sizes = [8, 32], strides = [1, 1]} : vector<8x128xf32> to vector<8x32xf32>
    %151 = arith.mulf %144, %132 : vector<8x32xf32>
    %152 = arith.mulf %143, %149 : vector<8x32xf32>
    %153 = arith.addf %151, %152 : vector<8x32xf32>
    %154 = math.tanh %153 : vector<8x32xf32>
    %155 = arith.mulf %150, %154 : vector<8x32xf32>
    %156 = vector.extract_strided_slice %6 {offsets = [56, 0], sizes = [8, 128], strides = [1, 1]} : vector<64x128xf32> to vector<8x128xf32>
    %cst_37 = arith.constant dense<0.000000e+00> : vector<8x128xf32>
    %157 = tpu.matmul %155, %0, %cst_37 {dimension_numbers = #tpu.dot_dimension_numbers<[1], [0], [0], [1], [0, 0, 1, 1], [], []>} : vector<8x32xf32>, vector<32x128xf32>, vector<8x128xf32> -> vector<8x128xf32>
    %158 = arith.addf %156, %157 : vector<8x128xf32>
    %159 = arith.negf %158 : vector<8x128xf32>
    %160 = math.exp %159 : vector<8x128xf32>
    %cst_38 = arith.constant 1.000000e+00 : f32
    %161 = vector.broadcast %cst_38 : f32 to vector<8x128xf32>
    %162 = arith.addf %161, %160 : vector<8x128xf32>
    %163 = arith.divf %161, %162 : vector<8x128xf32>
    %164 = vector.extract_strided_slice %163 {offsets = [0, 0], sizes = [8, 32], strides = [1, 1]} : vector<8x128xf32> to vector<8x32xf32>
    %165 = vector.extract_strided_slice %163 {offsets = [0, 32], sizes = [8, 32], strides = [1, 1]} : vector<8x128xf32> to vector<8x32xf32>
    %166 = vector.extract_strided_slice %163 {offsets = [0, 64], sizes = [8, 32], strides = [1, 1]} : vector<8x128xf32> to vector<8x32xf32>
    %cst_39 = arith.constant 2.000000e+00 : f32
    %167 = vector.broadcast %cst_39 : f32 to vector<8x32xf32>
    %168 = arith.mulf %167, %166 : vector<8x32xf32>
    %cst_40 = arith.constant 1.000000e+00 : f32
    %169 = vector.broadcast %cst_40 : f32 to vector<8x32xf32>
    %170 = arith.subf %168, %169 : vector<8x32xf32>
    %171 = vector.extract_strided_slice %163 {offsets = [0, 96], sizes = [8, 32], strides = [1, 1]} : vector<8x128xf32> to vector<8x32xf32>
    %172 = arith.mulf %165, %153 : vector<8x32xf32>
    %173 = arith.mulf %164, %170 : vector<8x32xf32>
    %174 = arith.addf %172, %173 : vector<8x32xf32>
    %175 = math.tanh %174 : vector<8x32xf32>
    %176 = arith.mulf %171, %175 : vector<8x32xf32>
    %c0_41 = arith.constant 0 : index
    %c0_42 = arith.constant 0 : index
    %177 = vector.load %arg4[%c0_41, %c0_42] : memref<1x32xf32, #tpu.memory_space<vmem>>, vector<1x32xf32>
    %178 = vector.broadcast %177 : vector<1x32xf32> to vector<8x32xf32>
    %179 = arith.mulf %176, %178 : vector<8x32xf32>
    %cst_43 = arith.constant dense<0.000000e+00> : vector<8xf32>
    %180 = vector.multi_reduction <add>, %179, %cst_43 [1] : vector<8x32xf32> to vector<8xf32>
    %181 = vector.shape_cast %180 : vector<8xf32> to vector<8x1xf32>
    %c0_44 = arith.constant 0 : index
    %c0_45 = arith.constant 0 : index
    %182 = vector.load %arg5[%c0_44, %c0_45] : memref<1x1xf32, #tpu.memory_space<vmem>>, vector<1x1xf32>
    %183 = vector.broadcast %182 : vector<1x1xf32> to vector<8x1xf32>
    %184 = arith.addf %181, %183 : vector<8x1xf32>
    %c0_46 = arith.constant 0 : index
    %c0_47 = arith.constant 0 : index
    %185 = vector.load %arg6[%c0_46, %c0_47] : memref<8x1xf32, #tpu.memory_space<vmem>>, vector<8x1xf32>
    tpu.vector_store %arg6[%c0_46, %c0_47], %184 {strides = array<i32>} : memref<8x1xf32, #tpu.memory_space<vmem>>, vector<8x1xf32>,
    return
  }
}

</mosaic_0001>

<llo_original>
// kernel: lstm_model_forward.1
$region0: #{lstm_model_forward.1}
  #allocation0 [shape = 'u32[]', space=smem, size = 0x4, offset = 0x4, fixed_abs, tag = 'smem constant byte address 0x4 - core index']
  #allocation1 [shape = 'u32[144,128]{1,0:T(1,128)}', space=vmem, size = 0x12000, scoped, tag = 'internal scratch']
  #allocation2 [shape = 'f32[1,1]{1,0:T(1,128)S(1)}', space=vmem, size = 0x200, scoped, tag = 'scoped memory for lstm_model_forward.1']
  %s0 = inlined_call_operand.vmem [shape: f32[64,4], index: 0, kind: input, shape index: {}]
  %s1 = inlined_call_operand.vmem [shape: f32[4,128], index: 1, kind: input, shape index: {}]
  %s2 = inlined_call_operand.vmem [shape: f32[32,128], index: 2, kind: input, shape index: {}]
  %s3 = inlined_call_operand.vmem [shape: f32[1,128], index: 3, kind: input, shape index: {}]
  %s4 = inlined_call_operand.vmem [shape: f32[1,32], index: 4, kind: input, shape index: {}]
  %s5 = inlined_call_operand.<no memory space> [shape: f32[1,1], index: 5, kind: input, shape index: {}]
  %s6 = inlined_call_operand.vmem [shape: f32[8,1], index: 6, kind: output, shape index: {}]
  %s7 = sld [smem:[#allocation0]]
  $region34: #{lstm_model_forward.1} parent=0
    _
  %s9 = ssub.s32 1, %s7
  %s10 = scalar_select 0, %s9, %s7
  %v11 = vstv %s5
  %12 = vst [vmem:[#allocation2] sm:$0x1] %v11
  // Predicated region
  $region2: #{lstm_model_forward.1} parent=0 // pred_check
    _
  $region3: #{lstm_model_forward.1} parent=0 // pred_check_branch
    %14 = sbr.rel (0) target = $region5
  $region4: #{lstm_model_forward.1} parent=0 // pred_region
    _
  $region5: #{lstm_model_forward.1} parent=0 // pred_fallthru
    _
  // Predicated region
  $region6: #{lstm_model_forward.1} parent=0 // pred_check
    _
  $region7: #{lstm_model_forward.1} parent=0 // pred_check_branch
    %16 = sbr.rel (0) target = $region9
  $region8: #{lstm_model_forward.1} parent=0 // pred_region
    _
  $region9: #{lstm_model_forward.1} parent=0 // pred_fallthru
    _
  // Predicated region
  $region10: #{lstm_model_forward.1} parent=0 // pred_check
    _
  $region11: #{lstm_model_forward.1} parent=0 // pred_check_branch
    %18 = sbr.rel (0) target = $region13
  $region12: #{lstm_model_forward.1} parent=0 // pred_region
    _
  $region13: #{lstm_model_forward.1} parent=0 // pred_fallthru
    _
  // Predicated region
  $region14: #{lstm_model_forward.1} parent=0 // pred_check
    _
  $region15: #{lstm_model_forward.1} parent=0 // pred_check_branch
    %20 = sbr.rel (0) target = $region17
  $region16: #{lstm_model_forward.1} parent=0 // pred_region
    _
  $region17: #{lstm_model_forward.1} parent=0 // pred_fallthru
    _
  // Predicated region
  $region18: #{lstm_model_forward.1} parent=0 // pred_check
    _
  $region19: #{lstm_model_forward.1} parent=0 // pred_check_branch
    %22 = sbr.rel (0) target = $region21
  $region20: #{lstm_model_forward.1} parent=0 // pred_region
    _
  $region21: #{lstm_model_forward.1} parent=0 // pred_fallthru
    _
  // Predicated region
  $region22: #{lstm_model_forward.1} parent=0 // pred_check
    _
  $region23: #{lstm_model_forward.1} parent=0 // pred_check_branch
    %24 = sbr.rel (0) target = $region25
  $region24: #{lstm_model_forward.1} parent=0 // pred_region
    _
  $region25: #{lstm_model_forward.1} parent=0 // pred_fallthru
    _
  %v25 = vld [vmem:[%s2] sm:$0xff]
  %v26 = vld [vmem:[%s2 + $0x8] sm:$0xff]
  %v27 = vld [vmem:[%s2 + $0x10] sm:$0xff]
  %v28 = vld [vmem:[%s2 + $0x18] sm:$0xff]
  %v29 = vld [vmem:[%s0] sm:$0xff]
  %v30 = vld [vmem:[%s0 + $0x8] sm:$0xff]
  %v31 = vld [vmem:[%s0 + $0x10] sm:$0xff]
  %v32 = vld [vmem:[%s0 + $0x18] sm:$0xff]
  %v33 = vld [vmem:[%s0 + $0x20] sm:$0xff]
  %v34 = vld [vmem:[%s0 + $0x28] sm:$0xff]
  %v35 = vld [vmem:[%s0 + $0x30] sm:$0xff]
  %v36 = vld [vmem:[%s0 + $0x38] sm:$0xff]
  %v37 = vld [vmem:[%s1] sm:$0xf]
  %v38 = vld [vmem:[%s3] sm:$0x1]
  %v40 = vlaneseq
  %v41 = vshrl.u32 %v40, 7
  %v42 = vsub.s32 0, %v41
  %v43 = vrot.slane %v38, %v42
  %vm45 = vcmask 31744
  %v47 = vsel %vm45, %v29, 0
  %v50 = vsel %vm45, %v30, 0
  %v53 = vsel %vm45, %v31, 0
  %v56 = vsel %vm45, %v32, 0
  %v59 = vsel %vm45, %v33, 0
  %v62 = vsel %vm45, %v34, 0
  %v65 = vsel %vm45, %v35, 0
  %v68 = vsel %vm45, %v36, 0
  %vm70 = vcmask 1043456
  %v72 = vsel %vm70, %v37, 0
  %74 = vmatprep.subr.mxu0 0.0
  %75 = vmatpush1.msra.mxu0 %v72
  %76 = vmatprep.subr.mxu0 0.0
  %77 = vmatpush1.msra.mxu0 0.0
  %78 = vmatprep.subr.mxu0 0.0
  %79 = vmatpush1.msra.mxu0 0.0
  %80 = vmatprep.subr.mxu0 0.0
  %81 = vmatpush1.msra.mxu0 0.0
  %82 = vmatprep.subr.mxu0 0.0
  %83 = vmatpush1.msra.mxu0 0.0
  %84 = vmatprep.subr.mxu0 0.0
  %85 = vmatpush1.msra.mxu0 0.0
  %86 = vmatprep.subr.mxu0 0.0
  %87 = vmatpush1.msra.mxu0 0.0
  %88 = vmatprep.subr.mxu0 0.0
  %89 = vmatpush1.msra.mxu0 0.0
  %90 = vmatprep.subr.mxu0 0.0
  %91 = vmatpush1.msra.mxu0 0.0
  %92 = vmatprep.subr.mxu0 0.0
  %93 = vmatpush1.msra.mxu0 0.0
  %94 = vmatprep.subr.mxu0 0.0
  %95 = vmatpush1.msra.mxu0 0.0
  %96 = vmatprep.subr.mxu0 0.0
  %97 = vmatpush1.msra.mxu0 0.0
  %98 = vmatprep.subr.mxu0 0.0
  %99 = vmatpush1.msra.mxu0 0.0
  %100 = vmatprep.subr.mxu0 0.0
  %101 = vmatpush1.msra.mxu0 0.0
  %102 = vmatprep.subr.mxu0 0.0
  %103 = vmatpush1.msra.mxu0 0.0
  %104 = vmatprep.subr.mxu0 0.0
  %105 = vmatpush1.msra.mxu0 0.0
  %106 = vmatprep.subr.mxu0 0.0
  %107 = vmatpush1.msra.mxu0 0.0
  %108 = vmatprep.subr.mxu0 0.0
  %109 = vmatpush1.msra.mxu0 0.0
  %110 = vmatprep.subr.mxu0 0.0
  %111 = vmatpush1.msra.mxu0 0.0
  %112 = vmatprep.subr.mxu0 0.0
  %113 = vmatpush1.msra.mxu0 0.0
  %114 = vmatprep.subr.mxu0 0.0
  %115 = vmatpush1.msra.mxu0 0.0
  %116 = vmatprep.subr.mxu0 0.0
  %117 = vmatpush1.msra.mxu0 0.0
  %118 = vmatprep.subr.mxu0 0.0
  %119 = vmatpush1.msra.mxu0 0.0
  %120 = vmatprep.subr.mxu0 0.0
  %121 = vmatpush1.msra.mxu0 0.0
  %122 = vmatprep.subr.mxu0 0.0
  %123 = vmatpush1.msra.mxu0 0.0
  %124 = vmatprep.subr.mxu0 0.0
  %125 = vmatpush1.msra.mxu0 0.0
  %126 = vmatprep.subr.mxu0 0.0
  %127 = vmatpush1.msra.mxu0 0.0
  %128 = vmatprep.subr.mxu0 0.0
  %129 = vmatpush1.msra.mxu0 0.0
  %130 = vmatprep.subr.mxu0 0.0
  %131 = vmatpush1.msra.mxu0 0.0
  %132 = vmatprep.subr.mxu0 0.0
  %133 = vmatpush1.msra.mxu0 0.0
  %134 = vmatprep.subr.mxu0 0.0
  %135 = vmatpush1.msra.mxu0 0.0
  %136 = vmatprep.subr.mxu0 0.0
  %137 = vmatpush1.msra.mxu0 0.0
  %138 = vmatprep.mubr.f32.mxu0 0.0
  %139 = vmatmul.mubr.f32.gmra.mrb[0].mxu0 %v47
  %v140 = vpop.f32.mrb[0].mxu0
  %v141 = vadd.f32 %v43, %v140
  %v142 = vpop.f32.mrb[0].mxu0
  %143 = vmatprep.mubr.f32.mxu0 0.0
  %144 = vmatmul.mubr.f32.gmra.mrb[0].mxu0 %v50
  %v145 = vpop.f32.mrb[0].mxu0
  %v146 = vadd.f32 %v43, %v145
  %v147 = vpop.f32.mrb[0].mxu0
  %148 = vmatprep.mubr.f32.mxu0 0.0
  %149 = vmatmul.mubr.f32.gmra.mrb[0].mxu0 %v53
  %v150 = vpop.f32.mrb[0].mxu0
  %v151 = vadd.f32 %v43, %v150
  %v152 = vpop.f32.mrb[0].mxu0
  %153 = vmatprep.mubr.f32.mxu0 0.0
  %154 = vmatmul.mubr.f32.gmra.mrb[0].mxu0 %v56
  %v155 = vpop.f32.mrb[0].mxu0
  %v156 = vadd.f32 %v43, %v155
  %v157 = vpop.f32.mrb[0].mxu0
  %158 = vmatprep.mubr.f32.mxu0 0.0
  %159 = vmatmul.mubr.f32.gmra.mrb[0].mxu0 %v59
  %v160 = vpop.f32.mrb[0].mxu0
  %v161 = vadd.f32 %v43, %v160
  %v162 = vpop.f32.mrb[0].mxu0
  %163 = vmatprep.mubr.f32.mxu0 0.0
  %164 = vmatmul.mubr.f32.gmra.mrb[0].mxu0 %v62
  %v165 = vpop.f32.mrb[0].mxu0
  %v166 = vadd.f32 %v43, %v165
  %v167 = vpop.f32.mrb[0].mxu0
  %168 = vmatprep.mubr.f32.mxu0 0.0
  %169 = vmatmul.mubr.f32.gmra.mrb[0].mxu0 %v65
  %v170 = vpop.f32.mrb[0].mxu0
  %v171 = vadd.f32 %v43, %v170
  %v172 = vpop.f32.mrb[0].mxu0
  %173 = vmatprep.mubr.f32.mxu0 0.0
  %174 = vmatmul.mubr.f32.gmra.mrb[0].mxu0 %v68
  %v175 = vpop.f32.mrb[0].mxu0
  %v176 = vadd.f32 %v43, %v175
  %v177 = vpop.f32.mrb[0].mxu0
  %178 = vdwg.mxu0
  %vm179 = vcmask 261120
  %v181 = vsel %vm179, 0.0, 0
  %183 = vmatprep.subr.mxu0 0.0
  %184 = vmatpush1.msra.mxu0 %v25
  %185 = vmatprep.subr.mxu0 0.0
  %186 = vmatpush1.msra.mxu0 %v26
  %187 = vmatprep.subr.mxu0 0.0
  %188 = vmatpush1.msra.mxu0 %v27
  %189 = vmatprep.subr.mxu0 0.0
  %190 = vmatpush1.msra.mxu0 %v28
  %191 = vmatprep.subr.mxu0 0.0
  %192 = vmatpush1.msra.mxu0 0.0
  %193 = vmatprep.subr.mxu0 0.0
  %194 = vmatpush1.msra.mxu0 0.0
  %195 = vmatprep.subr.mxu0 0.0
  %196 = vmatpush1.msra.mxu0 0.0
  %197 = vmatprep.subr.mxu0 0.0
  %198 = vmatpush1.msra.mxu0 0.0
  %199 = vmatprep.subr.mxu0 0.0
  %200 = vmatpush1.msra.mxu0 0.0
  %201 = vmatprep.subr.mxu0 0.0
  %202 = vmatpush1.msra.mxu0 0.0
  %203 = vmatprep.subr.mxu0 0.0
  %204 = vmatpush1.msra.mxu0 0.0
  %205 = vmatprep.subr.mxu0 0.0
  %206 = vmatpush1.msra.mxu0 0.0
  %207 = vmatprep.subr.mxu0 0.0
  %208 = vmatpush1.msra.mxu0 0.0
  %209 = vmatprep.subr.mxu0 0.0
  %210 = vmatpush1.msra.mxu0 0.0
  %211 = vmatprep.subr.mxu0 0.0
  %212 = vmatpush1.msra.mxu0 0.0
  %213 = vmatprep.subr.mxu0 0.0
  %214 = vmatpush1.msra.mxu0 0.0
  %215 = vmatprep.subr.mxu0 0.0
  %216 = vmatpush1.msra.mxu0 0.0
  %217 = vmatprep.subr.mxu0 0.0
  %218 = vmatpush1.msra.mxu0 0.0
  %219 = vmatprep.subr.mxu0 0.0
  %220 = vmatpush1.msra.mxu0 0.0
  %221 = vmatprep.subr.mxu0 0.0
  %222 = vmatpush1.msra.mxu0 0.0
  %223 = vmatprep.subr.mxu0 0.0
  %224 = vmatpush1.msra.mxu0 0.0
  %225 = vmatprep.subr.mxu0 0.0
  %226 = vmatpush1.msra.mxu0 0.0
  %227 = vmatprep.subr.mxu0 0.0
  %228 = vmatpush1.msra.mxu0 0.0
  %229 = vmatprep.subr.mxu0 0.0
  %230 = vmatpush1.msra.mxu0 0.0
  %231 = vmatprep.subr.mxu0 0.0
  %232 = vmatpush1.msra.mxu0 0.0
  %233 = vmatprep.subr.mxu0 0.0
  %234 = vmatpush1.msra.mxu0 0.0
  %235 = vmatprep.subr.mxu0 0.0
  %236 = vmatpush1.msra.mxu0 0.0
  %237 = vmatprep.subr.mxu0 0.0
  %238 = vmatpush1.msra.mxu0 0.0
  %239 = vmatprep.subr.mxu0 0.0
  %240 = vmatpush1.msra.mxu0 0.0
  %241 = vmatprep.subr.mxu0 0.0
  %242 = vmatpush1.msra.mxu0 0.0
  %243 = vmatprep.subr.mxu0 0.0
  %244 = vmatpush1.msra.mxu0 0.0
  %245 = vmatprep.subr.mxu0 0.0
  %246 = vmatpush1.msra.mxu0 0.0
  %247 = vmatprep.mubr.f32.mxu0 0.0
  %248 = vmatmul.mubr.f32.gmra.mrb[0].mxu0 %v181
  %v249 = vpop.f32.mrb[0].mxu0
  %v250 = vadd.f32 0.0, %v249
  %v251 = vpop.f32.mrb[0].mxu0
  %252 = vdwg.mxu0
  %v253 = vadd.f32 %v141, %v250
  %v254 = vxor.u32 %v253, 2147483648
  %v255 = vmul.f32 %v254, 1.442695
  %v256 = vpow.pop %v255
  %v257 = vadd.f32 %v256, 1.0
  %v258 = vrcp.pop %v257
  %v259 = vmul.f32 1.0, %v258
  %v260 = vmul.f32 %v259, 2.0
  %v261 = vsub.f32 %v260, 1.0
  %v262 = vmul.f32 %v259, 0.0
  %264 = vrot.lane.b32.xlu0 %v261, 64
  %v265 = vpop.permute.xlu0 %264
  %v267 = vmul.f32 %v259, %v265
  %269 = vrot.lane.b32.xlu0 %v267, 32
  %v270 = vpop.permute.xlu0 %269
  %v272 = vadd.f32 %v262, %v270
  %v273 = vtanh.pop %v272
  %275 = vrot.lane.b32.xlu0 %v273, 64
  %v276 = vpop.permute.xlu0 %275
  %v278 = vmul.f32 %v259, %v276
  %280 = vrot.lane.b32.xlu0 %v278, 32
  %v281 = vpop.permute.xlu0 %280
  %v282 = vsel %vm179, %v281, 0
  %284 = vmatprep.subr.mxu0 0.0
  %285 = vmatpush1.msra.mxu0 %v25
  %286 = vmatprep.subr.mxu0 0.0
  %287 = vmatpush1.msra.mxu0 %v26
  %288 = vmatprep.subr.mxu0 0.0
  %289 = vmatpush1.msra.mxu0 %v27
  %290 = vmatprep.subr.mxu0 0.0
  %291 = vmatpush1.msra.mxu0 %v28
  %292 = vmatprep.subr.mxu0 0.0
  %293 = vmatpush1.msra.mxu0 0.0
  %294 = vmatprep.subr.mxu0 0.0
  %295 = vmatpush1.msra.mxu0 0.0
  %296 = vmatprep.subr.mxu0 0.0
  %297 = vmatpush1.msra.mxu0 0.0
  %298 = vmatprep.subr.mxu0 0.0
  %299 = vmatpush1.msra.mxu0 0.0
  %300 = vmatprep.subr.mxu0 0.0
  %301 = vmatpush1.msra.mxu0 0.0
  %302 = vmatprep.subr.mxu0 0.0
  %303 = vmatpush1.msra.mxu0 0.0
  %304 = vmatprep.subr.mxu0 0.0
  %305 = vmatpush1.msra.mxu0 0.0
  %306 = vmatprep.subr.mxu0 0.0
  %307 = vmatpush1.msra.mxu0 0.0
  %308 = vmatprep.subr.mxu0 0.0
  %309 = vmatpush1.msra.mxu0 0.0
  %310 = vmatprep.subr.mxu0 0.0
  %311 = vmatpush1.msra.mxu0 0.0
  %312 = vmatprep.subr.mxu0 0.0
  %313 = vmatpush1.msra.mxu0 0.0
  %314 = vmatprep.subr.mxu0 0.0
  %315 = vmatpush1.msra.mxu0 0.0
  %316 = vmatprep.subr.mxu0 0.0
  %317 = vmatpush1.msra.mxu0 0.0
  %318 = vmatprep.subr.mxu0 0.0
  %319 = vmatpush1.msra.mxu0 0.0
  %320 = vmatprep.subr.mxu0 0.0
  %321 = vmatpush1.msra.mxu0 0.0
  %322 = vmatprep.subr.mxu0 0.0
  %323 = vmatpush1.msra.mxu0 0.0
  %324 = vmatprep.subr.mxu0 0.0
  %325 = vmatpush1.msra.mxu0 0.0
  %326 = vmatprep.subr.mxu0 0.0
  %327 = vmatpush1.msra.mxu0 0.0
  %328 = vmatprep.subr.mxu0 0.0
  %329 = vmatpush1.msra.mxu0 0.0
  %330 = vmatprep.subr.mxu0 0.0
  %331 = vmatpush1.msra.mxu0 0.0
  %332 = vmatprep.subr.mxu0 0.0
  %333 = vmatpush1.msra.mxu0 0.0
  %334 = vmatprep.subr.mxu0 0.0
  %335 = vmatpush1.msra.mxu0 0.0
  %336 = vmatprep.subr.mxu0 0.0
  %337 = vmatpush1.msra.mxu0 0.0
  %338 = vmatprep.subr.mxu0 0.0
  %339 = vmatpush1.msra.mxu0 0.0
  %340 = vmatprep.subr.mxu0 0.0
  %341 = vmatpush1.msra.mxu0 0.0
  %342 = vmatprep.subr.mxu0 0.0
  %343 = vmatpush1.msra.mxu0 0.0
  %344 = vmatprep.subr.mxu0 0.0
  %345 = vmatpush1.msra.mxu0 0.0
  %346 = vmatprep.subr.mxu0 0.0
  %347 = vmatpush1.msra.mxu0 0.0
  %348 = vmatprep.mubr.f32.mxu0 0.0
  %349 = vmatmul.mubr.f32.gmra.mrb[0].mxu0 %v282
  %v350 = vpop.f32.mrb[0].mxu0
  %v351 = vadd.f32 0.0, %v350
  %v352 = vpop.f32.mrb[0].mxu0
  %353 = vdwg.mxu0
  %v354 = vadd.f32 %v146, %v351
  %v355 = vxor.u32 %v354, 2147483648
  %v356 = vmul.f32 %v355, 1.442695
  %v357 = vpow.pop %v356
  %v358 = vadd.f32 %v357, 1.0
  %v359 = vrcp.pop %v358
  %v360 = vmul.f32 1.0, %v359
  %v361 = vmul.f32 %v360, 2.0
  %v362 = vsub.f32 %v361, 1.0
  %v363 = vmul.f32 %v360, %v272
  %365 = vrot.lane.b32.xlu0 %v362, 64
  %v366 = vpop.permute.xlu0 %365
  %v368 = vmul.f32 %v360, %v366
  %370 = vrot.lane.b32.xlu0 %v368, 32
  %v371 = vpop.permute.xlu0 %370
  %v373 = vadd.f32 %v363, %v371
  %v374 = vtanh.pop %v373
  %376 = vrot.lane.b32.xlu0 %v374, 64
  %v377 = vpop.permute.xlu0 %376
  %v379 = vmul.f32 %v360, %v377
  %381 = vrot.lane.b32.xlu0 %v379, 32
  %v382 = vpop.permute.xlu0 %381
  %v383 = vsel %vm179, %v382, 0
  %385 = vmatprep.subr.mxu0 0.0
  %386 = vmatpush1.msra.mxu0 %v25
  %387 = vmatprep.subr.mxu0 0.0
  %388 = vmatpush1.msra.mxu0 %v26
  %389 = vmatprep.subr.mxu0 0.0
  %390 = vmatpush1.msra.mxu0 %v27
  %391 = vmatprep.subr.mxu0 0.0
  %392 = vmatpush1.msra.mxu0 %v28
  %393 = vmatprep.subr.mxu0 0.0
  %394 = vmatpush1.msra.mxu0 0.0
  %395 = vmatprep.subr.mxu0 0.0
  %396 = vmatpush1.msra.mxu0 0.0
  %397 = vmatprep.subr.mxu0 0.0
  %398 = vmatpush1.msra.mxu0 0.0
  %399 = vmatprep.subr.mxu0 0.0
  %400 = vmatpush1.msra.mxu0 0.0
  %401 = vmatprep.subr.mxu0 0.0
  %402 = vmatpush1.msra.mxu0 0.0
  %403 = vmatprep.subr.mxu0 0.0
  %404 = vmatpush1.msra.mxu0 0.0
  %405 = vmatprep.subr.mxu0 0.0
  %406 = vmatpush1.msra.mxu0 0.0
  %407 = vmatprep.subr.mxu0 0.0
  %408 = vmatpush1.msra.mxu0 0.0
  %409 = vmatprep.subr.mxu0 0.0
  %410 = vmatpush1.msra.mxu0 0.0
  %411 = vmatprep.subr.mxu0 0.0
  %412 = vmatpush1.msra.mxu0 0.0
  %413 = vmatprep.subr.mxu0 0.0
  %414 = vmatpush1.msra.mxu0 0.0
  %415 = vmatprep.subr.mxu0 0.0
  %416 = vmatpush1.msra.mxu0 0.0
  %417 = vmatprep.subr.mxu0 0.0
  %418 = vmatpush1.msra.mxu0 0.0
  %419 = vmatprep.subr.mxu0 0.0
  %420 = vmatpush1.msra.mxu0 0.0
  %421 = vmatprep.subr.mxu0 0.0
  %422 = vmatpush1.msra.mxu0 0.0
  %423 = vmatprep.subr.mxu0 0.0
  %424 = vmatpush1.msra.mxu0 0.0
  %425 = vmatprep.subr.mxu0 0.0
  %426 = vmatpush1.msra.mxu0 0.0
  %427 = vmatprep.subr.mxu0 0.0
  %428 = vmatpush1.msra.mxu0 0.0
  %429 = vmatprep.subr.mxu0 0.0
  %430 = vmatpush1.msra.mxu0 0.0
  %431 = vmatprep.subr.mxu0 0.0
  %432 = vmatpush1.msra.mxu0 0.0
  %433 = vmatprep.subr.mxu0 0.0
  %434 = vmatpush1.msra.mxu0 0.0
  %435 = vmatprep.subr.mxu0 0.0
  %436 = vmatpush1.msra.mxu0 0.0
  %437 = vmatprep.subr.mxu0 0.0
  %438 = vmatpush1.msra.mxu0 0.0
  %439 = vmatprep.subr.mxu0 0.0
  %440 = vmatpush1.msra.mxu0 0.0
  %441 = vmatprep.subr.mxu0 0.0
  %442 = vmatpush1.msra.mxu0 0.0
  %443 = vmatprep.subr.mxu0 0.0
  %444 = vmatpush1.msra.mxu0 0.0
  %445 = vmatprep.subr.mxu0 0.0
  %446 = vmatpush1.msra.mxu0 0.0
  %447 = vmatprep.subr.mxu0 0.0
  %448 = vmatpush1.msra.mxu0 0.0
  %449 = vmatprep.mubr.f32.mxu0 0.0
  %450 = vmatmul.mubr.f32.gmra.mrb[0].mxu0 %v383
  %v451 = vpop.f32.mrb[0].mxu0
  %v452 = vadd.f32 0.0, %v451
  %v453 = vpop.f32.mrb[0].mxu0
  %454 = vdwg.mxu0
  %v455 = vadd.f32 %v151, %v452
  %v456 = vxor.u32 %v455, 2147483648
  %v457 = vmul.f32 %v456, 1.442695
  %v458 = vpow.pop %v457
  %v459 = vadd.f32 %v458, 1.0
  %v460 = vrcp.pop %v459
  %v461 = vmul.f32 1.0, %v460
  %v462 = vmul.f32 %v461, 2.0
  %v463 = vsub.f32 %v462, 1.0
  %v464 = vmul.f32 %v461, %v373
  %466 = vrot.lane.b32.xlu0 %v463, 64
  %v467 = vpop.permute.xlu0 %466
  %v469 = vmul.f32 %v461, %v467
  %471 = vrot.lane.b32.xlu0 %v469, 32
  %v472 = vpop.permute.xlu0 %471
  %v474 = vadd.f32 %v464, %v472
  %v475 = vtanh.pop %v474
  %477 = vrot.lane.b32.xlu0 %v475, 64
  %v478 = vpop.permute.xlu0 %477
  %v480 = vmul.f32 %v461, %v478
  %482 = vrot.lane.b32.xlu0 %v480, 32
  %v483 = vpop.permute.xlu0 %482
  %v484 = vsel %vm179, %v483, 0
  %486 = vmatprep.subr.mxu0 0.0
  %487 = vmatpush1.msra.mxu0 %v25
  %488 = vmatprep.subr.mxu0 0.0
  %489 = vmatpush1.msra.mxu0 %v26
  %490 = vmatprep.subr.mxu0 0.0
  %491 = vmatpush1.msra.mxu0 %v27
  %492 = vmatprep.subr.mxu0 0.0
  %493 = vmatpush1.msra.mxu0 %v28
  %494 = vmatprep.subr.mxu0 0.0
  %495 = vmatpush1.msra.mxu0 0.0
  %496 = vmatprep.subr.mxu0 0.0
  %497 = vmatpush1.msra.mxu0 0.0
  %498 = vmatprep.subr.mxu0 0.0
  %499 = vmatpush1.msra.mxu0 0.0
  %500 = vmatprep.subr.mxu0 0.0
  %501 = vmatpush1.msra.mxu0 0.0
  %502 = vmatprep.subr.mxu0 0.0
  %503 = vmatpush1.msra.mxu0 0.0
  %504 = vmatprep.subr.mxu0 0.0
  %505 = vmatpush1.msra.mxu0 0.0
  %506 = vmatprep.subr.mxu0 0.0
  %507 = vmatpush1.msra.mxu0 0.0
  %508 = vmatprep.subr.mxu0 0.0
  %509 = vmatpush1.msra.mxu0 0.0
  %510 = vmatprep.subr.mxu0 0.0
  %511 = vmatpush1.msra.mxu0 0.0
  %512 = vmatprep.subr.mxu0 0.0
  %513 = vmatpush1.msra.mxu0 0.0
  %514 = vmatprep.subr.mxu0 0.0
  %515 = vmatpush1.msra.mxu0 0.0
  %516 = vmatprep.subr.mxu0 0.0
  %517 = vmatpush1.msra.mxu0 0.0
  %518 = vmatprep.subr.mxu0 0.0
  %519 = vmatpush1.msra.mxu0 0.0
  %520 = vmatprep.subr.mxu0 0.0
  %521 = vmatpush1.msra.mxu0 0.0
  %522 = vmatprep.subr.mxu0 0.0
  %523 = vmatpush1.msra.mxu0 0.0
  %524 = vmatprep.subr.mxu0 0.0
  %525 = vmatpush1.msra.mxu0 0.0
  %526 = vmatprep.subr.mxu0 0.0
  %527 = vmatpush1.msra.mxu0 0.0
  %528 = vmatprep.subr.mxu0 0.0
  %529 = vmatpush1.msra.mxu0 0.0
  %530 = vmatprep.subr.mxu0 0.0
  %531 = vmatpush1.msra.mxu0 0.0
  %532 = vmatprep.subr.mxu0 0.0
  %533 = vmatpush1.msra.mxu0 0.0
  %534 = vmatprep.subr.mxu0 0.0
  %535 = vmatpush1.msra.mxu0 0.0
  %536 = vmatprep.subr.mxu0 0.0
  %537 = vmatpush1.msra.mxu0 0.0
  %538 = vmatprep.subr.mxu0 0.0
  %539 = vmatpush1.msra.mxu0 0.0
  %540 = vmatprep.subr.mxu0 0.0
  %541 = vmatpush1.msra.mxu0 0.0
  %542 = vmatprep.subr.mxu0 0.0
  %543 = vmatpush1.msra.mxu0 0.0
  %544 = vmatprep.subr.mxu0 0.0
  %545 = vmatpush1.msra.mxu0 0.0
  %546 = vmatprep.subr.mxu0 0.0
  %547 = vmatpush1.msra.mxu0 0.0
  %548 = vmatprep.subr.mxu0 0.0
  %549 = vmatpush1.msra.mxu0 0.0
  %550 = vmatprep.mubr.f32.mxu0 0.0
  %551 = vmatmul.mubr.f32.gmra.mrb[0].mxu0 %v484
  %v552 = vpop.f32.mrb[0].mxu0
  %v553 = vadd.f32 0.0, %v552
  %v554 = vpop.f32.mrb[0].mxu0
  %555 = vdwg.mxu0
  %v556 = vadd.f32 %v156, %v553
  %v557 = vxor.u32 %v556, 2147483648
  %v558 = vmul.f32 %v557, 1.442695
  %v559 = vpow.pop %v558
  %v560 = vadd.f32 %v559, 1.0
  %v561 = vrcp.pop %v560
  %v562 = vmul.f32 1.0, %v561
  %v563 = vmul.f32 %v562, 2.0
  %v564 = vsub.f32 %v563, 1.0
  %v565 = vmul.f32 %v562, %v474
  %567 = vrot.lane.b32.xlu0 %v564, 64
  %v568 = vpop.permute.xlu0 %567
  %v570 = vmul.f32 %v562, %v568
  %572 = vrot.lane.b32.xlu0 %v570, 32
  %v573 = vpop.permute.xlu0 %572
  %v575 = vadd.f32 %v565, %v573
  %v576 = vtanh.pop %v575
  %578 = vrot.lane.b32.xlu0 %v576, 64
  %v579 = vpop.permute.xlu0 %578
  %v581 = vmul.f32 %v562, %v579
  %583 = vrot.lane.b32.xlu0 %v581, 32
  %v584 = vpop.permute.xlu0 %583
  %v585 = vsel %vm179, %v584, 0
  %587 = vmatprep.subr.mxu0 0.0
  %588 = vmatpush1.msra.mxu0 %v25
  %589 = vmatprep.subr.mxu0 0.0
  %590 = vmatpush1.msra.mxu0 %v26
  %591 = vmatprep.subr.mxu0 0.0
  %592 = vmatpush1.msra.mxu0 %v27
  %593 = vmatprep.subr.mxu0 0.0
  %594 = vmatpush1.msra.mxu0 %v28
  %595 = vmatprep.subr.mxu0 0.0
  %596 = vmatpush1.msra.mxu0 0.0
  %597 = vmatprep.subr.mxu0 0.0
  %598 = vmatpush1.msra.mxu0 0.0
  %599 = vmatprep.subr.mxu0 0.0
  %600 = vmatpush1.msra.mxu0 0.0
  %601 = vmatprep.subr.mxu0 0.0
  %602 = vmatpush1.msra.mxu0 0.0
  %603 = vmatprep.subr.mxu0 0.0
  %604 = vmatpush1.msra.mxu0 0.0
  %605 = vmatprep.subr.mxu0 0.0
  %606 = vmatpush1.msra.mxu0 0.0
  %607 = vmatprep.subr.mxu0 0.0
  %608 = vmatpush1.msra.mxu0 0.0
  %609 = vmatprep.subr.mxu0 0.0
  %610 = vmatpush1.msra.mxu0 0.0
  %611 = vmatprep.subr.mxu0 0.0
  %612 = vmatpush1.msra.mxu0 0.0
  %613 = vmatprep.subr.mxu0 0.0
  %614 = vmatpush1.msra.mxu0 0.0
  %615 = vmatprep.subr.mxu0 0.0
  %616 = vmatpush1.msra.mxu0 0.0
  %617 = vmatprep.subr.mxu0 0.0
  %618 = vmatpush1.msra.mxu0 0.0
  %619 = vmatprep.subr.mxu0 0.0
  %620 = vmatpush1.msra.mxu0 0.0
  %621 = vmatprep.subr.mxu0 0.0
  %622 = vmatpush1.msra.mxu0 0.0
  %623 = vmatprep.subr.mxu0 0.0
  %624 = vmatpush1.msra.mxu0 0.0
  %625 = vmatprep.subr.mxu0 0.0
  %626 = vmatpush1.msra.mxu0 0.0
  %627 = vmatprep.subr.mxu0 0.0
  %628 = vmatpush1.msra.mxu0 0.0
  %629 = vmatprep.subr.mxu0 0.0
  %630 = vmatpush1.msra.mxu0 0.0
  %631 = vmatprep.subr.mxu0 0.0
  %632 = vmatpush1.msra.mxu0 0.0
  %633 = vmatprep.subr.mxu0 0.0
  %634 = vmatpush1.msra.mxu0 0.0
  %635 = vmatprep.subr.mxu0 0.0
  %636 = vmatpush1.msra.mxu0 0.0
  %637 = vmatprep.subr.mxu0 0.0
  %638 = vmatpush1.msra.mxu0 0.0
  %639 = vmatprep.subr.mxu0 0.0
  %640 = vmatpush1.msra.mxu0 0.0
  %641 = vmatprep.subr.mxu0 0.0
  %642 = vmatpush1.msra.mxu0 0.0
  %643 = vmatprep.subr.mxu0 0.0
  %644 = vmatpush1.msra.mxu0 0.0
  %645 = vmatprep.subr.mxu0 0.0
  %646 = vmatpush1.msra.mxu0 0.0
  %647 = vmatprep.subr.mxu0 0.0
  %648 = vmatpush1.msra.mxu0 0.0
  %649 = vmatprep.subr.mxu0 0.0
  %650 = vmatpush1.msra.mxu0 0.0
  %651 = vmatprep.mubr.f32.mxu0 0.0
  %652 = vmatmul.mubr.f32.gmra.mrb[0].mxu0 %v585
  %v653 = vpop.f32.mrb[0].mxu0
  %v654 = vadd.f32 0.0, %v653
  %v655 = vpop.f32.mrb[0].mxu0
  %656 = vdwg.mxu0
  %v657 = vadd.f32 %v161, %v654
  %v658 = vxor.u32 %v657, 2147483648
  %v659 = vmul.f32 %v658, 1.442695
  %v660 = vpow.pop %v659
  %v661 = vadd.f32 %v660, 1.0
  %v662 = vrcp.pop %v661
  %v663 = vmul.f32 1.0, %v662
  %v664 = vmul.f32 %v663, 2.0
  %v665 = vsub.f32 %v664, 1.0
  %v666 = vmul.f32 %v663, %v575
  %668 = vrot.lane.b32.xlu0 %v665, 64
  %v669 = vpop.permute.xlu0 %668
  %v671 = vmul.f32 %v663, %v669
  %673 = vrot.lane.b32.xlu0 %v671, 32
  %v674 = vpop.permute.xlu0 %673
  %v676 = vadd.f32 %v666, %v674
  %v677 = vtanh.pop %v676
  %679 = vrot.lane.b32.xlu0 %v677, 64
  %v680 = vpop.permute.xlu0 %679
  %v682 = vmul.f32 %v663, %v680
  %684 = vrot.lane.b32.xlu0 %v682, 32
  %v685 = vpop.permute.xlu0 %684
  %v686 = vsel %vm179, %v685, 0
  %688 = vmatprep.subr.mxu0 0.0
  %689 = vmatpush1.msra.mxu0 %v25
  %690 = vmatprep.subr.mxu0 0.0
  %691 = vmatpush1.msra.mxu0 %v26
  %692 = vmatprep.subr.mxu0 0.0
  %693 = vmatpush1.msra.mxu0 %v27
  %694 = vmatprep.subr.mxu0 0.0
  %695 = vmatpush1.msra.mxu0 %v28
  %696 = vmatprep.subr.mxu0 0.0
  %697 = vmatpush1.msra.mxu0 0.0
  %698 = vmatprep.subr.mxu0 0.0
  %699 = vmatpush1.msra.mxu0 0.0
  %700 = vmatprep.subr.mxu0 0.0
  %701 = vmatpush1.msra.mxu0 0.0
  %702 = vmatprep.subr.mxu0 0.0
  %703 = vmatpush1.msra.mxu0 0.0
  %704 = vmatprep.subr.mxu0 0.0
  %705 = vmatpush1.msra.mxu0 0.0
  %706 = vmatprep.subr.mxu0 0.0
  %707 = vmatpush1.msra.mxu0 0.0
  %708 = vmatprep.subr.mxu0 0.0
  %709 = vmatpush1.msra.mxu0 0.0
  %710 = vmatprep.subr.mxu0 0.0
  %711 = vmatpush1.msra.mxu0 0.0
  %712 = vmatprep.subr.mxu0 0.0
  %713 = vmatpush1.msra.mxu0 0.0
  %714 = vmatprep.subr.mxu0 0.0
  %715 = vmatpush1.msra.mxu0 0.0
  %716 = vmatprep.subr.mxu0 0.0
  %717 = vmatpush1.msra.mxu0 0.0
  %718 = vmatprep.subr.mxu0 0.0
  %719 = vmatpush1.msra.mxu0 0.0
  %720 = vmatprep.subr.mxu0 0.0
  %721 = vmatpush1.msra.mxu0 0.0
  %722 = vmatprep.subr.mxu0 0.0
  %723 = vmatpush1.msra.mxu0 0.0
  %724 = vmatprep.subr.mxu0 0.0
  %725 = vmatpush1.msra.mxu0 0.0
  %726 = vmatprep.subr.mxu0 0.0
  %727 = vmatpush1.msra.mxu0 0.0
  %728 = vmatprep.subr.mxu0 0.0
  %729 = vmatpush1.msra.mxu0 0.0
  %730 = vmatprep.subr.mxu0 0.0
  %731 = vmatpush1.msra.mxu0 0.0
  %732 = vmatprep.subr.mxu0 0.0
  %733 = vmatpush1.msra.mxu0 0.0
  %734 = vmatprep.subr.mxu0 0.0
  %735 = vmatpush1.msra.mxu0 0.0
  %736 = vmatprep.subr.mxu0 0.0
  %737 = vmatpush1.msra.mxu0 0.0
  %738 = vmatprep.subr.mxu0 0.0
  %739 = vmatpush1.msra.mxu0 0.0
  %740 = vmatprep.subr.mxu0 0.0
  %741 = vmatpush1.msra.mxu0 0.0
  %742 = vmatprep.subr.mxu0 0.0
  %743 = vmatpush1.msra.mxu0 0.0
  %744 = vmatprep.subr.mxu0 0.0
  %745 = vmatpush1.msra.mxu0 0.0
  %746 = vmatprep.subr.mxu0 0.0
  %747 = vmatpush1.msra.mxu0 0.0
  %748 = vmatprep.subr.mxu0 0.0
  %749 = vmatpush1.msra.mxu0 0.0
  %750 = vmatprep.subr.mxu0 0.0
  %751 = vmatpush1.msra.mxu0 0.0
  %752 = vmatprep.mubr.f32.mxu0 0.0
  %753 = vmatmul.mubr.f32.gmra.mrb[0].mxu0 %v686
  %v754 = vpop.f32.mrb[0].mxu0
  %v755 = vadd.f32 0.0, %v754
  %v756 = vpop.f32.mrb[0].mxu0
  %757 = vdwg.mxu0
  %v758 = vadd.f32 %v166, %v755
  %v759 = vxor.u32 %v758, 2147483648
  %v760 = vmul.f32 %v759, 1.442695
  %v761 = vpow.pop %v760
  %v762 = vadd.f32 %v761, 1.0
  %v763 = vrcp.pop %v762
  %v764 = vmul.f32 1.0, %v763
  %v765 = vmul.f32 %v764, 2.0
  %v766 = vsub.f32 %v765, 1.0
  %v767 = vmul.f32 %v764, %v676
  %769 = vrot.lane.b32.xlu0 %v766, 64
  %v770 = vpop.permute.xlu0 %769
  %v772 = vmul.f32 %v764, %v770
  %774 = vrot.lane.b32.xlu0 %v772, 32
  %v775 = vpop.permute.xlu0 %774
  %v777 = vadd.f32 %v767, %v775
  %v778 = vtanh.pop %v777
  %780 = vrot.lane.b32.xlu0 %v778, 64
  %v781 = vpop.permute.xlu0 %780
  %v783 = vmul.f32 %v764, %v781
  %785 = vrot.lane.b32.xlu0 %v783, 32
  %v786 = vpop.permute.xlu0 %785
  %v787 = vsel %vm179, %v786, 0
  %789 = vmatprep.subr.mxu0 0.0
  %790 = vmatpush1.msra.mxu0 %v25
  %791 = vmatprep.subr.mxu0 0.0
  %792 = vmatpush1.msra.mxu0 %v26
  %793 = vmatprep.subr.mxu0 0.0
  %794 = vmatpush1.msra.mxu0 %v27
  %795 = vmatprep.subr.mxu0 0.0
  %796 = vmatpush1.msra.mxu0 %v28
  %797 = vmatprep.subr.mxu0 0.0
  %798 = vmatpush1.msra.mxu0 0.0
  %799 = vmatprep.subr.mxu0 0.0
  %800 = vmatpush1.msra.mxu0 0.0
  %801 = vmatprep.subr.mxu0 0.0
  %802 = vmatpush1.msra.mxu0 0.0
  %803 = vmatprep.subr.mxu0 0.0
  %804 = vmatpush1.msra.mxu0 0.0
  %805 = vmatprep.subr.mxu0 0.0
  %806 = vmatpush1.msra.mxu0 0.0
  %807 = vmatprep.subr.mxu0 0.0
  %808 = vmatpush1.msra.mxu0 0.0
  %809 = vmatprep.subr.mxu0 0.0
  %810 = vmatpush1.msra.mxu0 0.0
  %811 = vmatprep.subr.mxu0 0.0
  %812 = vmatpush1.msra.mxu0 0.0
  %813 = vmatprep.subr.mxu0 0.0
  %814 = vmatpush1.msra.mxu0 0.0
  %815 = vmatprep.subr.mxu0 0.0
  %816 = vmatpush1.msra.mxu0 0.0
  %817 = vmatprep.subr.mxu0 0.0
  %818 = vmatpush1.msra.mxu0 0.0
  %819 = vmatprep.subr.mxu0 0.0
  %820 = vmatpush1.msra.mxu0 0.0
  %821 = vmatprep.subr.mxu0 0.0
  %822 = vmatpush1.msra.mxu0 0.0
  %823 = vmatprep.subr.mxu0 0.0
  %824 = vmatpush1.msra.mxu0 0.0
  %825 = vmatprep.subr.mxu0 0.0
  %826 = vmatpush1.msra.mxu0 0.0
  %827 = vmatprep.subr.mxu0 0.0
  %828 = vmatpush1.msra.mxu0 0.0
  %829 = vmatprep.subr.mxu0 0.0
  %830 = vmatpush1.msra.mxu0 0.0
  %831 = vmatprep.subr.mxu0 0.0
  %832 = vmatpush1.msra.mxu0 0.0
  %833 = vmatprep.subr.mxu0 0.0
  %834 = vmatpush1.msra.mxu0 0.0
  %835 = vmatprep.subr.mxu0 0.0
  %836 = vmatpush1.msra.mxu0 0.0
  %837 = vmatprep.subr.mxu0 0.0
  %838 = vmatpush1.msra.mxu0 0.0
  %839 = vmatprep.subr.mxu0 0.0
  %840 = vmatpush1.msra.mxu0 0.0
  %841 = vmatprep.subr.mxu0 0.0
  %842 = vmatpush1.msra.mxu0 0.0
  %843 = vmatprep.subr.mxu0 0.0
  %844 = vmatpush1.msra.mxu0 0.0
  %845 = vmatprep.subr.mxu0 0.0
  %846 = vmatpush1.msra.mxu0 0.0
  %847 = vmatprep.subr.mxu0 0.0
  %848 = vmatpush1.msra.mxu0 0.0
  %849 = vmatprep.subr.mxu0 0.0
  %850 = vmatpush1.msra.mxu0 0.0
  %851 = vmatprep.subr.mxu0 0.0
  %852 = vmatpush1.msra.mxu0 0.0
  %853 = vmatprep.mubr.f32.mxu0 0.0
  %854 = vmatmul.mubr.f32.gmra.mrb[0].mxu0 %v787
  %v855 = vpop.f32.mrb[0].mxu0
  %v856 = vadd.f32 0.0, %v855
  %v857 = vpop.f32.mrb[0].mxu0
  %858 = vdwg.mxu0
  %v859 = vadd.f32 %v171, %v856
  %v860 = vxor.u32 %v859, 2147483648
  %v861 = vmul.f32 %v860, 1.442695
  %v862 = vpow.pop %v861
  %v863 = vadd.f32 %v862, 1.0
  %v864 = vrcp.pop %v863
  %v865 = vmul.f32 1.0, %v864
  %v866 = vmul.f32 %v865, 2.0
  %v867 = vsub.f32 %v866, 1.0
  %v868 = vmul.f32 %v865, %v777
  %870 = vrot.lane.b32.xlu0 %v867, 64
  %v871 = vpop.permute.xlu0 %870
  %v873 = vmul.f32 %v865, %v871
  %875 = vrot.lane.b32.xlu0 %v873, 32
  %v876 = vpop.permute.xlu0 %875
  %v878 = vadd.f32 %v868, %v876
  %v879 = vtanh.pop %v878
  %881 = vrot.lane.b32.xlu0 %v879, 64
  %v882 = vpop.permute.xlu0 %881
  %v884 = vmul.f32 %v865, %v882
  %886 = vrot.lane.b32.xlu0 %v884, 32
  %v887 = vpop.permute.xlu0 %886
  %v888 = vsel %vm179, %v887, 0
  %890 = vmatprep.subr.mxu0 0.0
  %891 = vmatpush1.msra.mxu0 %v25
  %892 = vmatprep.subr.mxu0 0.0
  %893 = vmatpush1.msra.mxu0 %v26
  %894 = vmatprep.subr.mxu0 0.0
  %895 = vmatpush1.msra.mxu0 %v27
  %896 = vmatprep.subr.mxu0 0.0
  %897 = vmatpush1.msra.mxu0 %v28
  %898 = vmatprep.subr.mxu0 0.0
  %899 = vmatpush1.msra.mxu0 0.0
  %900 = vmatprep.subr.mxu0 0.0
  %901 = vmatpush1.msra.mxu0 0.0
  %902 = vmatprep.subr.mxu0 0.0
  %903 = vmatpush1.msra.mxu0 0.0
  %904 = vmatprep.subr.mxu0 0.0
  %905 = vmatpush1.msra.mxu0 0.0
  %906 = vmatprep.subr.mxu0 0.0
  %907 = vmatpush1.msra.mxu0 0.0
  %908 = vmatprep.subr.mxu0 0.0
  %909 = vmatpush1.msra.mxu0 0.0
  %910 = vmatprep.subr.mxu0 0.0
  %911 = vmatpush1.msra.mxu0 0.0
  %912 = vmatprep.subr.mxu0 0.0
  %913 = vmatpush1.msra.mxu0 0.0
  %914 = vmatprep.subr.mxu0 0.0
  %915 = vmatpush1.msra.mxu0 0.0
  %916 = vmatprep.subr.mxu0 0.0
  %917 = vmatpush1.msra.mxu0 0.0
  %918 = vmatprep.subr.mxu0 0.0
  %919 = vmatpush1.msra.mxu0 0.0
  %920 = vmatprep.subr.mxu0 0.0
  %921 = vmatpush1.msra.mxu0 0.0
  %922 = vmatprep.subr.mxu0 0.0
  %923 = vmatpush1.msra.mxu0 0.0
  %924 = vmatprep.subr.mxu0 0.0
  %925 = vmatpush1.msra.mxu0 0.0
  %926 = vmatprep.subr.mxu0 0.0
  %927 = vmatpush1.msra.mxu0 0.0
  %928 = vmatprep.subr.mxu0 0.0
  %929 = vmatpush1.msra.mxu0 0.0
  %930 = vmatprep.subr.mxu0 0.0
  %931 = vmatpush1.msra.mxu0 0.0
  %932 = vmatprep.subr.mxu0 0.0
  %933 = vmatpush1.msra.mxu0 0.0
  %934 = vmatprep.subr.mxu0 0.0
  %935 = vmatpush1.msra.mxu0 0.0
  %936 = vmatprep.subr.mxu0 0.0
  %937 = vmatpush1.msra.mxu0 0.0
  %938 = vmatprep.subr.mxu0 0.0
  %939 = vmatpush1.msra.mxu0 0.0
  %940 = vmatprep.subr.mxu0 0.0
  %941 = vmatpush1.msra.mxu0 0.0
  %942 = vmatprep.subr.mxu0 0.0
  %943 = vmatpush1.msra.mxu0 0.0
  %944 = vmatprep.subr.mxu0 0.0
  %945 = vmatpush1.msra.mxu0 0.0
  %946 = vmatprep.subr.mxu0 0.0
  %947 = vmatpush1.msra.mxu0 0.0
  %948 = vmatprep.subr.mxu0 0.0
  %949 = vmatpush1.msra.mxu0 0.0
  %950 = vmatprep.subr.mxu0 0.0
  %951 = vmatpush1.msra.mxu0 0.0
  %952 = vmatprep.subr.mxu0 0.0
  %953 = vmatpush1.msra.mxu0 0.0
  %954 = vmatprep.mubr.f32.mxu0 0.0
  %955 = vmatmul.mubr.f32.gmra.mrb[0].mxu0 %v888
  %v956 = vpop.f32.mrb[0].mxu0
  %v957 = vadd.f32 0.0, %v956
  %v958 = vpop.f32.mrb[0].mxu0
  %959 = vdwg.mxu0
  %v960 = vadd.f32 %v176, %v957
  %v961 = vxor.u32 %v960, 2147483648
  %v962 = vmul.f32 %v961, 1.442695
  %v963 = vpow.pop %v962
  %v964 = vadd.f32 %v963, 1.0
  %v965 = vrcp.pop %v964
  %v966 = vmul.f32 1.0, %v965
  %v967 = vmul.f32 %v966, 2.0
  %v968 = vsub.f32 %v967, 1.0
  %v969 = vmul.f32 %v966, %v878
  %971 = vrot.lane.b32.xlu0 %v968, 64
  %v972 = vpop.permute.xlu0 %971
  %v974 = vmul.f32 %v966, %v972
  %976 = vrot.lane.b32.xlu0 %v974, 32
  %v977 = vpop.permute.xlu0 %976
  %v979 = vadd.f32 %v969, %v977
  %v980 = vtanh.pop %v979
  %982 = vrot.lane.b32.xlu0 %v980, 64
  %v983 = vpop.permute.xlu0 %982
  %v985 = vmul.f32 %v966, %v983
  %v986 = vld [vmem:[%s4] sm:$0x1]
  %v988 = vlaneseq
  %v989 = vshrl.u32 %v988, 7
  %v990 = vsub.s32 0, %v989
  %v991 = vrot.slane %v986, %v990
  %992 = vrot.lane.b32.xlu0 %v991, 96
  %v993 = vpop.permute.xlu0 %992
  %v995 = vmul.f32 %v985, %v993
  %997 = vrot.lane.b32.xlu0 %v995, 32
  %v998 = vpop.permute.xlu0 %997
  %v1000 = vsel %vm179, %v998, 0.0
  %1001 = vadd.xlane.f32.xlu0 %v1000
  %v1002 = vpop.xlane.xlu0 %1001
  %v1003 = vld [vmem:[#allocation2] sm:$0x1]
  %v1005 = vlaneseq
  %v1006 = vshrl.u32 %v1005, 7
  %v1007 = vsub.s32 0, %v1006
  %v1008 = vrot.slane %v1003, %v1007
  %v1010 = vadd.f32 %v1002, %v1008
  %vm1011 = vcmask 7168
  %1012 = vst.msk [vmem:[%s6] sm:$0xff] %vm1011, %v1010
  // Predicated region
  $region26: #{lstm_model_forward.1} parent=0 // pred_check
    _
  $region27: #{lstm_model_forward.1} parent=0 // pred_check_branch
    %1014 = sbr.rel (0) target = $region29
  $region28: #{lstm_model_forward.1} parent=0 // pred_region
    _
  $region29: #{lstm_model_forward.1} parent=0 // pred_fallthru
    _
  // Predicated region
  $region30: #{lstm_model_forward.1} parent=0 // pred_check
    _
  $region31: #{lstm_model_forward.1} parent=0 // pred_check_branch
    %1016 = sbr.rel (0) target = $region33
  $region32: #{lstm_model_forward.1} parent=0 // pred_region
    _
  $region33: #{lstm_model_forward.1} parent=0 // pred_fallthru
    _

</llo_original>
